<compile_context>
chip_gen: v7x
topology: tpu7x:2x2x1
jax: 0.10.0
libtpu: 0.0.40
codegen_flags: <defaults>
</compile_context>

<pallas_src>
import functools

import jax
import jax.numpy as jnp
from jax.experimental import pallas as pl
from jax.experimental.pallas import tpu as pltpu


def _round_up(x: int, m: int) -> int:
    return ((x + m - 1) // m) * m


# Single-buffer pipeline mode for grid-invariant (VMEM-resident) operands.  Probe the
# kwarg once so the code degrades gracefully on jax versions without pipeline_mode.
try:
    _RESIDENT = {"pipeline_mode": pl.Buffered(1)}
    pl.BlockSpec((8, 128), lambda i: (0, 0), **_RESIDENT)
except Exception:  # pragma: no cover - older jax without pipeline_mode / Buffered
    _RESIDENT = {}


def mlp_kernel(x_ref, w1_ref, b1_ref, w2_ref, b2_ref, out_ref):
    # fc1 + ReLU: MXU matmul with f32 accumulation.  Padded hidden columns of w1/b1
    # are zero, so they stay exactly zero through the ReLU.
    h = jnp.dot(x_ref[...], w1_ref[...], preferred_element_type=jnp.float32)
    h = jnp.maximum(h + b1_ref[...], 0.0)                      # (TB, Hp) + (1, Hp)

    # fc2: padded hidden rows of w2 are zero; padded class columns carry bias -1e30.
    logits = jnp.dot(h.astype(w2_ref.dtype), w2_ref[...],
                     preferred_element_type=jnp.float32)
    logits = logits + b2_ref[...]

    # Numerically stable softmax over the lane-dense class axis.  Exact divide (the
    # denominator is only (TB, 1)) so rows sum to 1 at f32 precision.
    m = jnp.max(logits, axis=-1, keepdims=True)
    e = jnp.exp(logits - m)                                    # padded classes -> 0
    denom = jnp.sum(e, axis=-1, keepdims=True)
    out_ref[...] = (e / denom).astype(out_ref.dtype)


def pad_params(w1, b1, w2, b2, *, compute_dtype=jnp.float32):
    """Pad / cast parameters ONCE at model-load time (hoisted out of the call path).

    w1:(I,H), b1:(1,H) or (H,), w2:(H,C), b2:(1,C) or (C,)
    -> w1p:(I,Hp), b1p:(1,Hp), w2p:(Hp,Cp), b2p:(1,Cp) with Hp/Cp multiples of 128.
    """
    I, H = w1.shape
    C = w2.shape[1]
    H_p = _round_up(H, 128)
    C_p = _round_up(C, 128)
    cd = compute_dtype

    w1p = jnp.zeros((I, H_p), cd).at[:, :H].set(w1.astype(cd))
    b1p = jnp.zeros((1, H_p), jnp.float32).at[:, :H].set(
        b1.reshape(1, -1).astype(jnp.float32))
    w2p = jnp.zeros((H_p, C_p), cd).at[:H, :C].set(w2.astype(cd))
    # Padded class columns get -1e30 bias so softmax assigns them exactly zero
    # probability.  Biases stay in f32 so the mask is never downcast.
    b2p = jnp.full((1, C_p), -1e30, jnp.float32).at[:, :C].set(
        b2.reshape(1, -1).astype(jnp.float32))
    return w1p, b1p, w2p, b2p


def mlp_classifier(x, w1p, b1p, w2p, b2p, *, num_classes, block_b=None,
                   compute_dtype=jnp.float32):
    """x:(B,I) unpadded; padded params from pad_params().  Returns (B, num_classes)."""
    B, I = x.shape
    H_p = w1p.shape[1]
    C_p = w2p.shape[1]

    # Single cast for the bf16 path; no HBM zero-pad pass over the activations.
    if x.dtype != compute_dtype:
        x = x.astype(compute_dtype)

    itm = jnp.dtype(compute_dtype).itemsize
    row_align = 16 if itm == 2 else (32 if itm == 1 else 8)

    # VMEM ceiling from the actual part (v5e/v6e: 128 MiB, v7x: 64 MiB per TC),
    # leaving headroom for compiler-internal scratch.
    try:
        vmem_cap = int(pltpu.get_tpu_info().vmem_capacity_bytes)
    except Exception:
        vmem_cap = 64 << 20  # conservative (v7x per-TC)
    vmem_ceiling = int(vmem_cap * 0.85)

    # Weights/biases stay VMEM-resident across the whole grid (single-buffered).
    resident_bytes = (I * H_p + H_p * C_p) * itm + (H_p + C_p) * 4
    # TODO(synk): add a K-tiled (contraction grid axis + f32 accumulator) fallback for
    # models whose resident weights exceed ~half of VMEM (v7x: 64 MiB/TC).
    if resident_bytes > vmem_ceiling // 2:
        raise ValueError(
            "fc1/fc2 weights do not fit VMEM-resident on this part; use "
            "compute_dtype=jnp.bfloat16 or add contraction tiling.")

    if block_b is None:
        if B > 512:
            block_b = 512
        elif B >= 2 * row_align:
            # Keep >=2 grid steps so the "parallel" batch axis can shard across
            # v7x's two TensorCores.
            block_b = _round_up(pl.cdiv(B, 2), row_align)
        else:
            block_b = _round_up(max(B, 1), row_align)

    grid = (pl.cdiv(B, block_b),)

    stream_bytes = 2 * block_b * I * itm + 2 * block_b * C_p * 4   # x / out, 2-deep
    interm_bytes = block_b * H_p * 4 + 2 * block_b * C_p * 4       # h, logits / exp
    vmem_bytes = resident_bytes + stream_bytes + interm_bytes + (2 << 20)
    vmem_limit = int(min(max(vmem_bytes, 4 << 20), vmem_ceiling))

    cost = pl.CostEstimate(
        flops=int(2 * B * (I * H_p + H_p * C_p)),
        transcendentals=int(B * C_p),
        bytes_accessed=int(B * I * itm + resident_bytes + B * C_p * 4),
    )

    out_p = pl.pallas_call(
        mlp_kernel,
        out_shape=jax.ShapeDtypeStruct((B, C_p), jnp.float32),
        grid=grid,
        in_specs=[
            # Streamed activations: last dim == full extent, Mosaic lane-pads in VMEM.
            pl.BlockSpec((block_b, I), lambda i: (i, 0)),
            # Grid-invariant, VMEM-resident weights / biases (single-buffered).
            pl.BlockSpec((I, H_p), lambda i: (0, 0), **_RESIDENT),
            pl.BlockSpec((1, H_p), lambda i: (0, 0), **_RESIDENT),
            pl.BlockSpec((H_p, C_p), lambda i: (0, 0), **_RESIDENT),
            pl.BlockSpec((1, C_p), lambda i: (0, 0), **_RESIDENT),
        ],
        out_specs=pl.BlockSpec((block_b, C_p), lambda i: (i, 0)),
        compiler_params=pltpu.CompilerParams(
            dimension_semantics=("parallel",),
            vmem_limit_bytes=vmem_limit,
        ),
        cost_estimate=cost,
    )(x, w1p, b1p, w2p, b2p)

    # The kernel's (B, Cp) store stays lane-dense and unmasked; this column slice only
    # exists to honor the module's (B, num_classes) output contract.
    # TODO(synk): consumers that can read the padded buffer (e.g. argmax) should skip it.
    return out_p[:, :num_classes]


def init_params(key, input_size, hidden_size, num_classes):
    # Deterministic init mirroring nn.Linear's U(-1/sqrt(fan_in), 1/sqrt(fan_in)).
    k1, k2, k3, k4 = jax.random.split(key, 4)
    lim1 = 1.0 / jnp.sqrt(jnp.float32(input_size))
    lim2 = 1.0 / jnp.sqrt(jnp.float32(hidden_size))
    w1 = jax.random.uniform(k1, (input_size, hidden_size), jnp.float32, -lim1, lim1)
    b1 = jax.random.uniform(k2, (1, hidden_size), jnp.float32, -lim1, lim1)
    w2 = jax.random.uniform(k3, (hidden_size, num_classes), jnp.float32, -lim2, lim2)
    b2 = jax.random.uniform(k4, (1, num_classes), jnp.float32, -lim2, lim2)
    return w1, b1, w2, b2


if __name__ == "__main__":
    batch, input_size, hidden_size, num_classes = 8, 32, 64, 16

    key = jax.random.PRNGKey(0)
    kx, kp = jax.random.split(key)
    x = jax.random.normal(kx, (batch, input_size), jnp.float32)
    w1, b1, w2, b2 = init_params(kp, input_size, hidden_size, num_classes)

    # Pad / cast the parameters once, at "model load" time.
    w1p, b1p, w2p, b2p = pad_params(w1, b1, w2, b2, compute_dtype=jnp.float32)

    run = jax.jit(functools.partial(mlp_classifier, num_classes=num_classes,
                                    compute_dtype=jnp.float32))
    out = run(x, w1p, b1p, w2p, b2p)
    out = jax.block_until_ready(out)

    # Reference in plain JAX (same forward as the PyTorch module).
    h_ref = jnp.maximum(x @ w1 + b1, 0.0)
    ref = jax.nn.softmax(h_ref @ w2 + b2, axis=-1)

    assert out.shape == (batch, num_classes)
    assert jnp.allclose(out, ref, atol=2e-3, rtol=2e-3)
    assert jnp.allclose(jnp.sum(out, axis=-1), 1.0, atol=1e-3)

    print("KERNEL_OK")
</pallas_src>

<mosaic_0001>
module attributes {stable_mosaic.version = 11 : i64} {
  func.func @mlp_kernel(%arg0: i32, %arg1: memref<8x32xf32, #tpu.memory_space<vmem>>, %arg2: memref<32x128xf32, #tpu.memory_space<vmem>>, %arg3: memref<1x128xf32, #tpu.memory_space<vmem>>, %arg4: memref<128x128xf32, #tpu.memory_space<vmem>>, %arg5: memref<1x128xf32, #tpu.memory_space<vmem>>, %arg6: memref<8x128xf32, #tpu.memory_space<vmem>>) attributes {dimension_semantics = [#tpu.dimension_semantics<parallel>], iteration_bounds = array<i64: 1>, scalar_prefetch = 0 : i64, scratch_operands = 0 : i64, tpu.core_type = #tpu.core_type<tc>, window_params = [{transform_indices = @transform_0, window_bounds = array<i64: 8, 32>}, {pipeline_mode = #tpu.pipeline_mode<synchronous>, transform_indices = @transform_1, window_bounds = array<i64: 32, 128>}, {pipeline_mode = #tpu.pipeline_mode<synchronous>, transform_indices = @transform_2, window_bounds = array<i64: 1, 128>}, {pipeline_mode = #tpu.pipeline_mode<synchronous>, transform_indices = @transform_3, window_bounds = array<i64: 128, 128>}, {pipeline_mode = #tpu.pipeline_mode<synchronous>, transform_indices = @transform_4, window_bounds = array<i64: 1, 128>}, {transform_indices = @transform_5, window_bounds = array<i64: 8, 128>}]} {
    %c0 = arith.constant 0 : index
    %c0_0 = arith.constant 0 : index
    %0 = vector.load %arg1[%c0, %c0_0] : memref<8x32xf32, #tpu.memory_space<vmem>>, vector<8x32xf32>
    %c0_1 = arith.constant 0 : index
    %c0_2 = arith.constant 0 : index
    %1 = vector.load %arg2[%c0_1, %c0_2] : memref<32x128xf32, #tpu.memory_space<vmem>>, vector<32x128xf32>
    %cst = arith.constant dense<0.000000e+00> : vector<8x128xf32>
    %2 = tpu.matmul %0, %1, %cst {dimension_numbers = #tpu.dot_dimension_numbers<[1], [0], [0], [1], [0, 0, 1, 1], [], []>} : vector<8x32xf32>, vector<32x128xf32>, vector<8x128xf32> -> vector<8x128xf32>
    %c0_3 = arith.constant 0 : index
    %c0_4 = arith.constant 0 : index
    %3 = vector.load %arg3[%c0_3, %c0_4] : memref<1x128xf32, #tpu.memory_space<vmem>>, vector<1x128xf32>
    %4 = vector.broadcast %3 : vector<1x128xf32> to vector<8x128xf32>
    %5 = arith.addf %2, %4 : vector<8x128xf32>
    %cst_5 = arith.constant 0.000000e+00 : f32
    %6 = vector.broadcast %cst_5 : f32 to vector<8x128xf32>
    %7 = arith.maximumf %5, %6 : vector<8x128xf32>
    %c0_6 = arith.constant 0 : index
    %c0_7 = arith.constant 0 : index
    %8 = vector.load %arg4[%c0_6, %c0_7] : memref<128x128xf32, #tpu.memory_space<vmem>>, vector<128x128xf32>
    %cst_8 = arith.constant dense<0.000000e+00> : vector<8x128xf32>
    %9 = tpu.matmul %7, %8, %cst_8 {dimension_numbers = #tpu.dot_dimension_numbers<[1], [0], [0], [1], [0, 0, 1, 1], [], []>} : vector<8x128xf32>, vector<128x128xf32>, vector<8x128xf32> -> vector<8x128xf32>
    %c0_9 = arith.constant 0 : index
    %c0_10 = arith.constant 0 : index
    %10 = vector.load %arg5[%c0_9, %c0_10] : memref<1x128xf32, #tpu.memory_space<vmem>>, vector<1x128xf32>
    %11 = vector.broadcast %10 : vector<1x128xf32> to vector<8x128xf32>
    %12 = arith.addf %9, %11 : vector<8x128xf32>
    %cst_11 = arith.constant dense<0xFF800000> : vector<8xf32>
    %13 = vector.multi_reduction <maximumf>, %12, %cst_11 [1] : vector<8x128xf32> to vector<8xf32>
    %14 = vector.shape_cast %13 : vector<8xf32> to vector<8x1xf32>
    %15 = vector.broadcast %14 : vector<8x1xf32> to vector<8x128xf32>
    %16 = arith.subf %12, %15 : vector<8x128xf32>
    %17 = math.exp %16 : vector<8x128xf32>
    %cst_12 = arith.constant dense<0.000000e+00> : vector<8xf32>
    %18 = vector.multi_reduction <add>, %17, %cst_12 [1] : vector<8x128xf32> to vector<8xf32>
    %19 = vector.shape_cast %18 : vector<8xf32> to vector<8x1xf32>
    %20 = vector.broadcast %19 : vector<8x1xf32> to vector<8x128xf32>
    %21 = arith.divf %17, %20 : vector<8x128xf32>
    %c0_13 = arith.constant 0 : index
    %c0_14 = arith.constant 0 : index
    %22 = vector.load %arg6[%c0_13, %c0_14] : memref<8x128xf32, #tpu.memory_space<vmem>>, vector<8x128xf32>
    tpu.vector_store %arg6[%c0_13, %c0_14], %21 {strides = array<i32>} : memref<8x128xf32, #tpu.memory_space<vmem>>, vector<8x128xf32>,
    return
  }
  func.func @transform_0(%arg0: i32) -> (i32, i32) {
    %c0_i32 = arith.constant 0 : i32
    %c0_i32_0 = arith.constant 0 : i32
    return %arg0, %c0_i32 : i32, i32
  }
  func.func @transform_1(%arg0: i32) -> (i32, i32) {
    %c0_i32 = arith.constant 0 : i32
    %c0_i32_0 = arith.constant 0 : i32
    %c0_i32_1 = arith.constant 0 : i32
    return %c0_i32, %c0_i32_0 : i32, i32
  }
  func.func @transform_2(%arg0: i32) -> (i32, i32) {
    %c0_i32 = arith.constant 0 : i32
    %c0_i32_0 = arith.constant 0 : i32
    %c0_i32_1 = arith.constant 0 : i32
    return %c0_i32, %c0_i32_0 : i32, i32
  }
  func.func @transform_3(%arg0: i32) -> (i32, i32) {
    %c0_i32 = arith.constant 0 : i32
    %c0_i32_0 = arith.constant 0 : i32
    %c0_i32_1 = arith.constant 0 : i32
    return %c0_i32, %c0_i32_0 : i32, i32
  }
  func.func @transform_4(%arg0: i32) -> (i32, i32) {
    %c0_i32 = arith.constant 0 : i32
    %c0_i32_0 = arith.constant 0 : i32
    %c0_i32_1 = arith.constant 0 : i32
    return %c0_i32, %c0_i32_0 : i32, i32
  }
  func.func @transform_5(%arg0: i32) -> (i32, i32) {
    %c0_i32 = arith.constant 0 : i32
    %c0_i32_0 = arith.constant 0 : i32
    return %arg0, %c0_i32 : i32, i32
  }
}

</mosaic_0001>

<llo_original>
// kernel: mlp_classifier.1
$region0: #{mlp_classifier.1}
  #allocation0 [shape = 'u32[]', space=smem, size = 0x4, offset = 0x4, fixed_abs, tag = 'smem constant byte address 0x4 - core index']
  #allocation1 [shape = 'u32[144,128]{1,0:T(1,128)}', space=vmem, size = 0x12000, scoped, tag = 'internal scratch']
  %s0 = inlined_call_operand.hbm [shape: f32[8,32], index: 0, kind: input, shape index: {}]
  %s1 = inlined_call_operand.hbm [shape: f32[32,128], index: 1, kind: input, shape index: {}]
  %s2 = inlined_call_operand.vmem [shape: f32[1,128], index: 2, kind: input, shape index: {}]
  %s3 = inlined_call_operand.hbm [shape: f32[128,128], index: 3, kind: input, shape index: {}]
  %s4 = inlined_call_operand.vmem [shape: f32[1,128], index: 4, kind: input, shape index: {}]
  %s5 = inlined_call_operand.hbm [shape: f32[8,128], index: 5, kind: output, shape index: {}]
  %s6 = sld [smem:[#allocation0]]
  $region42: #{mlp_classifier.1} parent=0
    _
  %s8 = ssub.s32 1, %s6
  %s9 = scalar_select 0, %s8, %s6
  $region1: #{mlp_classifier.1} parent=0
    #allocation2 [shape = 'u8[4096]{0}', space=vmem, size = 0x1000, scoped, tag = 'input window, operand 0, single buffered']
    #allocation3 [shape = 's32[1]{0}', space=sflag, size = 0x4, scoped, tag = 'scoped memory for mlp_classifier.1']
    #allocation4 [shape = 's32[1]{0}', space=sflag, size = 0x4, scoped, tag = 'scoped memory for mlp_classifier.1']
    #allocation5 [shape = 'u8[16384]{0}', space=vmem, size = 0x4000, scoped, tag = 'input window, operand 1, single buffered']
    #allocation6 [shape = 's32[1]{0}', space=sflag, size = 0x4, scoped, tag = 'scoped memory for mlp_classifier.1']
    #allocation7 [shape = 'u8[65536]{0}', space=vmem, size = 0x10000, scoped, tag = 'input window, operand 3, single buffered']
    #allocation8 [shape = 'u8[4096]{0}', space=vmem, size = 0x1000, scoped, tag = 'output window, operand 0, single buffered']
    %10 = vsyncpa [#allocation3], 0
    %11 = vsyncpa [#allocation6], 0
    %12 = vsyncpa [#allocation4], 0
    // Predicated region
    $region2: #{mlp_classifier.1} parent=1 // pred_check
      _
    $region3: #{mlp_classifier.1} parent=1 // pred_check_branch
      %14 = sbr.rel (0) target = $region5
    $region4: #{mlp_classifier.1} parent=1 // pred_region
      %s16 = ssub.s32 128, 128
      %17 = vsyncadd [#allocation3], %s16
      %s19 = sshll.u32 [#allocation2], 4
      %s20 = int_to_ptr.vmem [resolvable:$true] %s19
      %22 = dma.hbm_to_vmem [thread:$0]  %s0, 128, %s20, [#allocation3]
    $region5: #{mlp_classifier.1} parent=1 // pred_fallthru
      _
    // Predicated region
    $region6: #{mlp_classifier.1} parent=1 // pred_check
      _
    $region7: #{mlp_classifier.1} parent=1 // pred_check_branch
      %24 = sbr.rel (0) target = $region9
    $region8: #{mlp_classifier.1} parent=1 // pred_region
      %s26 = ssub.s32 512, 512
      %27 = vsyncadd [#allocation6], %s26
      %s28 = sshll.u32 [#allocation5], 4
      %s29 = int_to_ptr.vmem [resolvable:$true] %s28
      %34 = dma.hbm_to_vmem [thread:$0]  %s1, 512, %s29, [#allocation6], 128, 128, 8
    $region9: #{mlp_classifier.1} parent=1 // pred_fallthru
      _
    // Predicated region
    $region10: #{mlp_classifier.1} parent=1 // pred_check
      _
    $region11: #{mlp_classifier.1} parent=1 // pred_check_branch
      %36 = sbr.rel (0) target = $region13
    $region12: #{mlp_classifier.1} parent=1 // pred_region
      _
    $region13: #{mlp_classifier.1} parent=1 // pred_fallthru
      _
    // Predicated region
    $region14: #{mlp_classifier.1} parent=1 // pred_check
      _
    $region15: #{mlp_classifier.1} parent=1 // pred_check_branch
      %38 = sbr.rel (0) target = $region17
    $region16: #{mlp_classifier.1} parent=1 // pred_region
      %s40 = ssub.s32 2048, 2048
      %41 = vsyncadd [#allocation6], %s40
      %s42 = sshll.u32 [#allocation7], 4
      %s43 = int_to_ptr.vmem [resolvable:$true] %s42
      %48 = dma.hbm_to_vmem [thread:$0]  %s3, 2048, %s43, [#allocation6], 128, 128, 8
    $region17: #{mlp_classifier.1} parent=1 // pred_fallthru
      _
    // Predicated region
    $region18: #{mlp_classifier.1} parent=1 // pred_check
      _
    $region19: #{mlp_classifier.1} parent=1 // pred_check_branch
      %50 = sbr.rel (0) target = $region21
    $region20: #{mlp_classifier.1} parent=1 // pred_region
      _
    $region21: #{mlp_classifier.1} parent=1 // pred_fallthru
      _
    // Predicated region
    $region22: #{mlp_classifier.1} parent=1 // pred_check
      _
    $region23: #{mlp_classifier.1} parent=1 // pred_check_branch
      %52 = sbr.rel (0) target = $region25
    $region24: #{mlp_classifier.1} parent=1 // pred_region
      %53 = dma.done [#allocation3], 128
    $region25: #{mlp_classifier.1} parent=1 // pred_fallthru
      _
    // Predicated region
    $region26: #{mlp_classifier.1} parent=1 // pred_check
      _
    $region27: #{mlp_classifier.1} parent=1 // pred_check_branch
      %55 = sbr.rel (0) target = $region29
    $region28: #{mlp_classifier.1} parent=1 // pred_region
      %56 = dma.done [#allocation6], 512
    $region29: #{mlp_classifier.1} parent=1 // pred_fallthru
      _
    // Predicated region
    $region30: #{mlp_classifier.1} parent=1 // pred_check
      _
    $region31: #{mlp_classifier.1} parent=1 // pred_check_branch
      %58 = sbr.rel (0) target = $region33
    $region32: #{mlp_classifier.1} parent=1 // pred_region
      %59 = dma.done [#allocation6], 2048
    $region33: #{mlp_classifier.1} parent=1 // pred_fallthru
      _
    %v60 = vld [vmem:[#allocation2] sm:$0xff]
    %v61 = vld [vmem:[#allocation5] sm:$0xff]
    %v62 = vld [vmem:[#allocation5 + $0x8] sm:$0xff]
    %v63 = vld [vmem:[#allocation5 + $0x10] sm:$0xff]
    %v64 = vld [vmem:[#allocation5 + $0x18] sm:$0xff]
    %v65 = vld [vmem:[%s2] sm:$0x1]
    %v67 = vlaneseq
    %v68 = vshrl.u32 %v67, 7
    %v69 = vsub.s32 0, %v68
    %v70 = vrot.slane %v65, %v69
    %vm72 = vcmask 261120
    %v74 = vsel %vm72, %v60, 0
    %76 = vmatprep.subr.mxu0 0.0
    %77 = vmatpush1.msra.mxu0 %v61
    %78 = vmatprep.subr.mxu0 0.0
    %79 = vmatpush1.msra.mxu0 %v62
    %80 = vmatprep.subr.mxu0 0.0
    %81 = vmatpush1.msra.mxu0 %v63
    %82 = vmatprep.subr.mxu0 0.0
    %83 = vmatpush1.msra.mxu0 %v64
    %84 = vmatprep.subr.mxu0 0.0
    %85 = vmatpush1.msra.mxu0 0.0
    %86 = vmatprep.subr.mxu0 0.0
    %87 = vmatpush1.msra.mxu0 0.0
    %88 = vmatprep.subr.mxu0 0.0
    %89 = vmatpush1.msra.mxu0 0.0
    %90 = vmatprep.subr.mxu0 0.0
    %91 = vmatpush1.msra.mxu0 0.0
    %92 = vmatprep.subr.mxu0 0.0
    %93 = vmatpush1.msra.mxu0 0.0
    %94 = vmatprep.subr.mxu0 0.0
    %95 = vmatpush1.msra.mxu0 0.0
    %96 = vmatprep.subr.mxu0 0.0
    %97 = vmatpush1.msra.mxu0 0.0
    %98 = vmatprep.subr.mxu0 0.0
    %99 = vmatpush1.msra.mxu0 0.0
    %100 = vmatprep.subr.mxu0 0.0
    %101 = vmatpush1.msra.mxu0 0.0
    %102 = vmatprep.subr.mxu0 0.0
    %103 = vmatpush1.msra.mxu0 0.0
    %104 = vmatprep.subr.mxu0 0.0
    %105 = vmatpush1.msra.mxu0 0.0
    %106 = vmatprep.subr.mxu0 0.0
    %107 = vmatpush1.msra.mxu0 0.0
    %108 = vmatprep.subr.mxu0 0.0
    %109 = vmatpush1.msra.mxu0 0.0
    %110 = vmatprep.subr.mxu0 0.0
    %111 = vmatpush1.msra.mxu0 0.0
    %112 = vmatprep.subr.mxu0 0.0
    %113 = vmatpush1.msra.mxu0 0.0
    %114 = vmatprep.subr.mxu0 0.0
    %115 = vmatpush1.msra.mxu0 0.0
    %116 = vmatprep.subr.mxu0 0.0
    %117 = vmatpush1.msra.mxu0 0.0
    %118 = vmatprep.subr.mxu0 0.0
    %119 = vmatpush1.msra.mxu0 0.0
    %120 = vmatprep.subr.mxu0 0.0
    %121 = vmatpush1.msra.mxu0 0.0
    %122 = vmatprep.subr.mxu0 0.0
    %123 = vmatpush1.msra.mxu0 0.0
    %124 = vmatprep.subr.mxu0 0.0
    %125 = vmatpush1.msra.mxu0 0.0
    %126 = vmatprep.subr.mxu0 0.0
    %127 = vmatpush1.msra.mxu0 0.0
    %128 = vmatprep.subr.mxu0 0.0
    %129 = vmatpush1.msra.mxu0 0.0
    %130 = vmatprep.subr.mxu0 0.0
    %131 = vmatpush1.msra.mxu0 0.0
    %132 = vmatprep.subr.mxu0 0.0
    %133 = vmatpush1.msra.mxu0 0.0
    %134 = vmatprep.subr.mxu0 0.0
    %135 = vmatpush1.msra.mxu0 0.0
    %136 = vmatprep.subr.mxu0 0.0
    %137 = vmatpush1.msra.mxu0 0.0
    %138 = vmatprep.subr.mxu0 0.0
    %139 = vmatpush1.msra.mxu0 0.0
    %140 = vmatprep.mubr.f32.mxu0 0.0
    %141 = vmatmul.mubr.f32.gmra.mrb[0].mxu0 %v74
    %v142 = vpop.f32.mrb[0].mxu0
    %v143 = vadd.f32 %v70, %v142
    %v144 = vpop.f32.mrb[0].mxu0
    %145 = vdwg.mxu0
    %v146 = vmax.f32 %v143, 0.0
    %v147 = vld [vmem:[#allocation7] sm:$0xff]
    %v148 = vld [vmem:[#allocation7 + $0x8] sm:$0xff]
    %v149 = vld [vmem:[#allocation7 + $0x10] sm:$0xff]
    %v150 = vld [vmem:[#allocation7 + $0x18] sm:$0xff]
    %v151 = vld [vmem:[#allocation7 + $0x20] sm:$0xff]
    %v152 = vld [vmem:[#allocation7 + $0x28] sm:$0xff]
    %v153 = vld [vmem:[#allocation7 + $0x30] sm:$0xff]
    %v154 = vld [vmem:[#allocation7 + $0x38] sm:$0xff]
    %v155 = vld [vmem:[#allocation7 + $0x40] sm:$0xff]
    %v156 = vld [vmem:[#allocation7 + $0x48] sm:$0xff]
    %v157 = vld [vmem:[#allocation7 + $0x50] sm:$0xff]
    %v158 = vld [vmem:[#allocation7 + $0x58] sm:$0xff]
    %v159 = vld [vmem:[#allocation7 + $0x60] sm:$0xff]
    %v160 = vld [vmem:[#allocation7 + $0x68] sm:$0xff]
    %v161 = vld [vmem:[#allocation7 + $0x70] sm:$0xff]
    %v162 = vld [vmem:[#allocation7 + $0x78] sm:$0xff]
    %v163 = vld [vmem:[%s4] sm:$0x1]
    %v165 = vlaneseq
    %v166 = vshrl.u32 %v165, 7
    %v167 = vsub.s32 0, %v166
    %v168 = vrot.slane %v163, %v167
    %170 = vmatprep.subr.mxu0 0.0
    %171 = vmatpush1.msra.mxu0 %v147
    %172 = vmatprep.subr.mxu0 0.0
    %173 = vmatpush1.msra.mxu0 %v148
    %174 = vmatprep.subr.mxu0 0.0
    %175 = vmatpush1.msra.mxu0 %v149
    %176 = vmatprep.subr.mxu0 0.0
    %177 = vmatpush1.msra.mxu0 %v150
    %178 = vmatprep.subr.mxu0 0.0
    %179 = vmatpush1.msra.mxu0 %v151
    %180 = vmatprep.subr.mxu0 0.0
    %181 = vmatpush1.msra.mxu0 %v152
    %182 = vmatprep.subr.mxu0 0.0
    %183 = vmatpush1.msra.mxu0 %v153
    %184 = vmatprep.subr.mxu0 0.0
    %185 = vmatpush1.msra.mxu0 %v154
    %186 = vmatprep.subr.mxu0 0.0
    %187 = vmatpush1.msra.mxu0 %v155
    %188 = vmatprep.subr.mxu0 0.0
    %189 = vmatpush1.msra.mxu0 %v156
    %190 = vmatprep.subr.mxu0 0.0
    %191 = vmatpush1.msra.mxu0 %v157
    %192 = vmatprep.subr.mxu0 0.0
    %193 = vmatpush1.msra.mxu0 %v158
    %194 = vmatprep.subr.mxu0 0.0
    %195 = vmatpush1.msra.mxu0 %v159
    %196 = vmatprep.subr.mxu0 0.0
    %197 = vmatpush1.msra.mxu0 %v160
    %198 = vmatprep.subr.mxu0 0.0
    %199 = vmatpush1.msra.mxu0 %v161
    %200 = vmatprep.subr.mxu0 0.0
    %201 = vmatpush1.msra.mxu0 %v162
    %202 = vmatprep.subr.mxu0 0.0
    %203 = vmatpush1.msra.mxu0 0.0
    %204 = vmatprep.subr.mxu0 0.0
    %205 = vmatpush1.msra.mxu0 0.0
    %206 = vmatprep.subr.mxu0 0.0
    %207 = vmatpush1.msra.mxu0 0.0
    %208 = vmatprep.subr.mxu0 0.0
    %209 = vmatpush1.msra.mxu0 0.0
    %210 = vmatprep.subr.mxu0 0.0
    %211 = vmatpush1.msra.mxu0 0.0
    %212 = vmatprep.subr.mxu0 0.0
    %213 = vmatpush1.msra.mxu0 0.0
    %214 = vmatprep.subr.mxu0 0.0
    %215 = vmatpush1.msra.mxu0 0.0
    %216 = vmatprep.subr.mxu0 0.0
    %217 = vmatpush1.msra.mxu0 0.0
    %218 = vmatprep.subr.mxu0 0.0
    %219 = vmatpush1.msra.mxu0 0.0
    %220 = vmatprep.subr.mxu0 0.0
    %221 = vmatpush1.msra.mxu0 0.0
    %222 = vmatprep.subr.mxu0 0.0
    %223 = vmatpush1.msra.mxu0 0.0
    %224 = vmatprep.subr.mxu0 0.0
    %225 = vmatpush1.msra.mxu0 0.0
    %226 = vmatprep.subr.mxu0 0.0
    %227 = vmatpush1.msra.mxu0 0.0
    %228 = vmatprep.subr.mxu0 0.0
    %229 = vmatpush1.msra.mxu0 0.0
    %230 = vmatprep.subr.mxu0 0.0
    %231 = vmatpush1.msra.mxu0 0.0
    %232 = vmatprep.subr.mxu0 0.0
    %233 = vmatpush1.msra.mxu0 0.0
    %234 = vmatprep.mubr.f32.mxu0 0.0
    %235 = vmatmul.mubr.f32.gmra.mrb[0].mxu0 %v146
    %v236 = vpop.f32.mrb[0].mxu0
    %v237 = vadd.f32 %v168, %v236
    %v238 = vpop.f32.mrb[0].mxu0
    %239 = vdwg.mxu0
    %240 = vmax.xlane.f32.xlu0 %v237
    %v241 = vpop.xlane.xlu0 %240
    %v242 = vsub.f32 %v237, %v241
    %v243 = vmul.f32 %v242, 1.442695
    %v244 = vpow.pop %v243
    %245 = vadd.xlane.f32.xlu0 %v244
    %v246 = vpop.xlane.xlu0 %245
    %v247 = vrcp.pop %v246
    %v248 = vmul.f32 %v244, %v247
    %249 = vst [vmem:[#allocation8] sm:$0xff] %v248
    // Predicated region
    $region34: #{mlp_classifier.1} parent=1 // pred_check
      _
    $region35: #{mlp_classifier.1} parent=1 // pred_check_branch
      %251 = sbr.rel (0) target = $region37
    $region36: #{mlp_classifier.1} parent=1 // pred_region
      %s253 = ssub.s32 128, 128
      %254 = vsyncadd [#allocation4], %s253
      %s256 = sshll.u32 [#allocation8], 4
      %s257 = int_to_ptr.vmem [resolvable:$true] %s256
      %259 = dma.vmem_to_hbm [thread:$0]  %s257, 128, %s5, [#allocation4]
    $region37: #{mlp_classifier.1} parent=1 // pred_fallthru
      _
    // Predicated region
    $region38: #{mlp_classifier.1} parent=1 // pred_check
      _
    $region39: #{mlp_classifier.1} parent=1 // pred_check_branch
      %261 = sbr.rel (0) target = $region41
    $region40: #{mlp_classifier.1} parent=1 // pred_region
      %262 = dma.done [#allocation4], 128
    $region41: #{mlp_classifier.1} parent=1 // pred_fallthru
      _
    %263 = vsyncpa [#allocation3], 1
    %264 = vsyncpa [#allocation6], 1
    %265 = vsyncpa [#allocation4], 1

</llo_original>
